<compile_context>
chip_gen: v5e
topology: v5e:2x2
jax: 0.10.0
libtpu: 0.0.40
codegen_flags: <defaults>
</compile_context>

<pallas_src>
import functools

import jax
import jax.numpy as jnp
from jax.experimental import pallas as pl
from jax.experimental.pallas import tpu as pltpu


def _head_kernel(x_ref, w_ref, b_ref, out_ref):
    """Fused detection head for one tile of pixels.

    x_ref   : (TM, C)      flattened NHWC pixels
    w_ref   : (C, NLANE)   [w_cls | w_box/scale | 0-pad]   (NLANE = 128)
    b_ref   : (1, NLANE)   [b_cls | b_box/scale | 0-pad]
    out_ref : (TM, NLANE)  lane-dense fused output (scores | scaled boxes | pad)
    """
    out_ref[...] = (
        jnp.dot(x_ref[...], w_ref[...], preferred_element_type=jnp.float32)
        + b_ref[...]
    )


def convert_to_mmdet_result(scores, boxes, num_classes):
    """mmdet-style result as one [M, num_classes, 5] array:
    per class, rows are [x1, y1, x2, y2, class_score].
    """
    # TODO(synk): mmdet applies NMS / score thresholding inside the opaque
    # detector before this step; that logic lives in the wrapped model.
    m = scores.shape[0]
    boxes_b = jnp.broadcast_to(boxes[:, None, :], (m, num_classes, 4))
    return jnp.concatenate([boxes_b, scores[:, :, None]], axis=-1)


@functools.partial(jax.jit, static_argnames=("num_classes", "tile_m"))
def model_warper_forward(img, w_cls, b_cls, w_box, b_box, scale_factor,
                         *, num_classes=80, tile_m=1024):
    """End-to-end ModelWarper.forward.

    img: [B, C, H, W] (NCHW, like the PyTorch wrapper's input).
    Returns the mmdet-format result [B*H*W, num_classes, 5] with boxes already
    divided by scale_factor.
    """
    B, C, H, W = img.shape
    M = B * H * W
    # Auto-clamp tile size to the problem (static Python ints at trace time).
    tile_m = min(tile_m, M)
    assert M % tile_m == 0, "B*H*W must be a multiple of tile_m"
    assert tile_m % 8 == 0, "tile_m must be a multiple of 8"

    # NCHW -> NHWC -> flatten spatial+batch onto the M axis (cheap glue pass:
    # M*C floats vs the M*128-float kernel output; XLA fuses it with the cast).
    x = jnp.transpose(img, (0, 2, 3, 1)).reshape(M, C).astype(jnp.float32)

    # Fold scale_factor into the box projection (wrapper-side; ~20 floats).
    scale = scale_factor.astype(jnp.float32)
    w_box_s = w_box.astype(jnp.float32) / scale[None, :]
    b_box_s = b_box.astype(jnp.float32) / scale

    # Fuse [w_cls | w_box_scaled] and zero-pad the lane axis to 128.
    n_out = num_classes + 4
    n_lane = ((n_out + 127) // 128) * 128
    w_fused = jnp.concatenate([w_cls.astype(jnp.float32), w_box_s], axis=1)
    w_fused = jnp.pad(w_fused, ((0, 0), (0, n_lane - n_out)))
    b_fused = jnp.concatenate([b_cls.astype(jnp.float32), b_box_s], axis=0)
    b_fused = jnp.pad(b_fused, (0, n_lane - n_out)).reshape(1, n_lane)

    grid = (M // tile_m,)
    fused = pl.pallas_call(
        _head_kernel,
        out_shape=jax.ShapeDtypeStruct((M, n_lane), jnp.float32),
        grid=grid,
        in_specs=[
            pl.BlockSpec((tile_m, C), lambda i: (i, 0)),       # x tile
            pl.BlockSpec((C, n_lane), lambda i: (0, 0)),       # fused W (resident)
            pl.BlockSpec((1, n_lane), lambda i: (0, 0)),       # fused bias (resident)
        ],
        out_specs=pl.BlockSpec((tile_m, n_lane), lambda i: (i, 0)),
        compiler_params=pltpu.CompilerParams(
            dimension_semantics=("parallel",)),
    )(x, w_fused, b_fused)

    # Lazy lane-slices: inside this jit they fuse into the broadcast+concat
    # below (no materialized scores/boxes intermediates).
    scores = fused[:, :num_classes]
    boxes = fused[:, num_classes:num_classes + 4]
    return convert_to_mmdet_result(scores, boxes, num_classes)


if __name__ == "__main__":
    key = jax.random.PRNGKey(0)
    B, C, H, W = 2, 4, 16, 16
    NUM_CLASSES = 80
    M = B * H * W

    k_img, k_wc, k_bc, k_wb, k_bb = jax.random.split(key, 5)
    img = jax.random.normal(k_img, (B, C, H, W), dtype=jnp.float32)

    # Deterministic synthetic detector-head parameters.
    # TODO(synk): the real wrapped backbone/detector is not specified by the
    # module; this 1x1-conv head stands in for it.
    w_cls = jax.random.normal(k_wc, (C, NUM_CLASSES), dtype=jnp.float32) * 0.1
    b_cls = jax.random.normal(k_bc, (NUM_CLASSES,), dtype=jnp.float32) * 0.01
    w_box = jax.random.normal(k_wb, (C, 4), dtype=jnp.float32) * 0.1
    b_box = jax.random.normal(k_bb, (4,), dtype=jnp.float32) * 0.01

    # scale_factor from img_metas: (w_scale, h_scale, w_scale, h_scale)
    scale_factor = jnp.array([1.25, 1.5, 1.25, 1.5], dtype=jnp.float32)

    result = model_warper_forward(
        img, w_cls, b_cls, w_box, b_box, scale_factor,
        num_classes=NUM_CLASSES)
    jax.block_until_ready(result)
    assert result.shape == (M, NUM_CLASSES, 5)

    # Reference check against plain JAX (true division for boxes).
    x_ref = jnp.transpose(img, (0, 2, 3, 1)).reshape(M, C)
    scores_ref = x_ref @ w_cls + b_cls
    boxes_ref = (x_ref @ w_box + b_box) / scale_factor[None, :]
    result_ref = jnp.concatenate(
        [jnp.broadcast_to(boxes_ref[:, None, :], (M, NUM_CLASSES, 4)),
         scores_ref[:, :, None]], axis=-1)
    assert jnp.allclose(result, result_ref, atol=1e-4, rtol=1e-4)

    print("KERNEL_OK")
</pallas_src>

<mosaic_0001>
module attributes {stable_mosaic.version = 11 : i64} {
  func.func @_head_kernel(%arg0: i32, %arg1: memref<512x4xf32, #tpu.memory_space<vmem>>, %arg2: memref<4x128xf32, #tpu.memory_space<vmem>>, %arg3: memref<1x128xf32, #tpu.memory_space<vmem>>, %arg4: memref<512x128xf32, #tpu.memory_space<vmem>>) attributes {dimension_semantics = [#tpu.dimension_semantics<parallel>], iteration_bounds = array<i64: 1>, scalar_prefetch = 0 : i64, scratch_operands = 0 : i64, tpu.core_type = #tpu.core_type<tc>, window_params = [{transform_indices = @transform_0, window_bounds = array<i64: 512, 4>}, {pipeline_mode = #tpu.pipeline_mode<synchronous>, transform_indices = @transform_1, window_bounds = array<i64: 4, 128>}, {pipeline_mode = #tpu.pipeline_mode<synchronous>, transform_indices = @transform_2, window_bounds = array<i64: 1, 128>}, {transform_indices = @transform_3, window_bounds = array<i64: 512, 128>}]} {
    %c0 = arith.constant 0 : index
    %c0_0 = arith.constant 0 : index
    %0 = vector.load %arg1[%c0, %c0_0] : memref<512x4xf32, #tpu.memory_space<vmem>>, vector<512x4xf32>
    %c0_1 = arith.constant 0 : index
    %c0_2 = arith.constant 0 : index
    %1 = vector.load %arg2[%c0_1, %c0_2] : memref<4x128xf32, #tpu.memory_space<vmem>>, vector<4x128xf32>
    %cst = arith.constant dense<0.000000e+00> : vector<512x128xf32>
    %2 = tpu.matmul %0, %1, %cst {dimension_numbers = #tpu.dot_dimension_numbers<[1], [0], [0], [1], [0, 0, 1, 1], [], []>} : vector<512x4xf32>, vector<4x128xf32>, vector<512x128xf32> -> vector<512x128xf32>
    %c0_3 = arith.constant 0 : index
    %c0_4 = arith.constant 0 : index
    %3 = vector.load %arg3[%c0_3, %c0_4] : memref<1x128xf32, #tpu.memory_space<vmem>>, vector<1x128xf32>
    %4 = vector.broadcast %3 : vector<1x128xf32> to vector<512x128xf32>
    %5 = arith.addf %2, %4 : vector<512x128xf32>
    %c0_5 = arith.constant 0 : index
    %c0_6 = arith.constant 0 : index
    %6 = vector.load %arg4[%c0_5, %c0_6] : memref<512x128xf32, #tpu.memory_space<vmem>>, vector<512x128xf32>
    tpu.vector_store %arg4[%c0_5, %c0_6], %5 {strides = array<i32>} : memref<512x128xf32, #tpu.memory_space<vmem>>, vector<512x128xf32>,
    return
  }
  func.func @transform_0(%arg0: i32) -> (i32, i32) {
    %c0_i32 = arith.constant 0 : i32
    %c0_i32_0 = arith.constant 0 : i32
    return %arg0, %c0_i32 : i32, i32
  }
  func.func @transform_1(%arg0: i32) -> (i32, i32) {
    %c0_i32 = arith.constant 0 : i32
    %c0_i32_0 = arith.constant 0 : i32
    %c0_i32_1 = arith.constant 0 : i32
    return %c0_i32, %c0_i32_0 : i32, i32
  }
  func.func @transform_2(%arg0: i32) -> (i32, i32) {
    %c0_i32 = arith.constant 0 : i32
    %c0_i32_0 = arith.constant 0 : i32
    %c0_i32_1 = arith.constant 0 : i32
    return %c0_i32, %c0_i32_0 : i32, i32
  }
  func.func @transform_3(%arg0: i32) -> (i32, i32) {
    %c0_i32 = arith.constant 0 : i32
    %c0_i32_0 = arith.constant 0 : i32
    return %arg0, %c0_i32 : i32, i32
  }
}

</mosaic_0001>

<llo_original>
// kernel: div.9
$region0: #{div.9}
  #allocation0 [shape = 's32[1]{0}', space=sflag, size = 0x4, scoped, tag = 'scoped memory for div.9']
  %s0 = inlined_call_operand.vmem [shape: f32[4], index: 0, kind: input, shape index: {}]
  %s1 = inlined_call_operand.vmem [shape: f32[4], index: 1, kind: input, shape index: {}]
  %s2 = inlined_call_operand.vmem [shape: f32[4], index: 2, kind: output, shape index: {}]
  %v3 = vld [vmem:[%s0] sm:$0x1]
  %v4 = vld [vmem:[%s1] sm:$0x1]
  %5 = xla_tuple %v3, %v4
  %6 = xla_tuple %5
  %v7 = vrcp.pop %v4
  %v8 = vmul.f32 %v4, %v7
  %v9 = vsub.f32 1.0, %v8
  %v10 = vmul.f32 %v7, %v9
  %v11 = vadd.f32 %v7, %v10
  %vm12 = vweird.f32 %v4
  %vm13 = vweird.f32 %v7
  %vm14 = vmor %vm12, %vm13
  %v15 = vsel %vm14, %v7, %v11
  %v16 = vand.u32 2147483647, %v4
  %vm17 = vcmp.eq.f32.partialorder %v16, 8.507059e+37
  %v18 = vand.u32 %v4, 2147483648
  %v19 = vor.u32 1.1754944e-38, %v18
  %v20 = vsel %vm17, %v19, %v15
  %v21 = vmul.f32 %v3, %v20
  %22 = xla_tuple %v21
  %23 = vst [vmem:[%s2] sm:$0x1] %v21

// kernel: model_warper_forward.1
$region0: #{model_warper_forward.1}
  #allocation0 [shape = 'u32[]', space=smem, size = 0x4, offset = 0x4, fixed_abs, tag = 'smem constant byte address 0x4 - core index']
  #allocation1 [shape = 'u32[72,128]{1,0:T(1,128)}', space=vmem, size = 0x9000, scoped, tag = 'internal scratch']
  %s0 = inlined_call_operand.vmem [shape: f32[512,4], index: 0, kind: input, shape index: {}]
  %s1 = inlined_call_operand.vmem [shape: f32[4,128], index: 1, kind: input, shape index: {}]
  %s2 = inlined_call_operand.vmem [shape: f32[1,128], index: 2, kind: input, shape index: {}]
  %s3 = inlined_call_operand.vmem [shape: f32[512,128], index: 3, kind: output, shape index: {}]
  %s4 = sld [smem:[#allocation0]]
  $region22: #{model_warper_forward.1} parent=0
    _
  %s6 = ssub.s32 1, %s4
  %s7 = scalar_select 0, %s6, %s4
  // Predicated region
  $region2: #{model_warper_forward.1} parent=0 // pred_check
    _
  $region3: #{model_warper_forward.1} parent=0 // pred_check_branch
    %9 = sbr.rel (0) target = $region5
  $region4: #{model_warper_forward.1} parent=0 // pred_region
    _
  $region5: #{model_warper_forward.1} parent=0 // pred_fallthru
    _
  // Predicated region
  $region6: #{model_warper_forward.1} parent=0 // pred_check
    _
  $region7: #{model_warper_forward.1} parent=0 // pred_check_branch
    %11 = sbr.rel (0) target = $region9
  $region8: #{model_warper_forward.1} parent=0 // pred_region
    _
  $region9: #{model_warper_forward.1} parent=0 // pred_fallthru
    _
  // Predicated region
  $region10: #{model_warper_forward.1} parent=0 // pred_check
    _
  $region11: #{model_warper_forward.1} parent=0 // pred_check_branch
    %13 = sbr.rel (0) target = $region13
  $region12: #{model_warper_forward.1} parent=0 // pred_region
    _
  $region13: #{model_warper_forward.1} parent=0 // pred_fallthru
    _
  %v14 = vld [vmem:[%s0] sm:$0xff]
  %v15 = vld [vmem:[%s0 + $0x8] sm:$0xff]
  %v16 = vld [vmem:[%s0 + $0x10] sm:$0xff]
  %v17 = vld [vmem:[%s0 + $0x18] sm:$0xff]
  %v18 = vld [vmem:[%s0 + $0x20] sm:$0xff]
  %v19 = vld [vmem:[%s0 + $0x28] sm:$0xff]
  %v20 = vld [vmem:[%s0 + $0x30] sm:$0xff]
  %v21 = vld [vmem:[%s0 + $0x38] sm:$0xff]
  %v22 = vld [vmem:[%s0 + $0x40] sm:$0xff]
  %v23 = vld [vmem:[%s0 + $0x48] sm:$0xff]
  %v24 = vld [vmem:[%s0 + $0x50] sm:$0xff]
  %v25 = vld [vmem:[%s0 + $0x58] sm:$0xff]
  %v26 = vld [vmem:[%s0 + $0x60] sm:$0xff]
  %v27 = vld [vmem:[%s0 + $0x68] sm:$0xff]
  %v28 = vld [vmem:[%s0 + $0x70] sm:$0xff]
  %v29 = vld [vmem:[%s0 + $0x78] sm:$0xff]
  %v30 = vld [vmem:[%s0 + $0x80] sm:$0xff]
  %v31 = vld [vmem:[%s0 + $0x88] sm:$0xff]
  %v32 = vld [vmem:[%s0 + $0x90] sm:$0xff]
  %v33 = vld [vmem:[%s0 + $0x98] sm:$0xff]
  %v34 = vld [vmem:[%s0 + $0xa0] sm:$0xff]
  %v35 = vld [vmem:[%s0 + $0xa8] sm:$0xff]
  %v36 = vld [vmem:[%s0 + $0xb0] sm:$0xff]
  %v37 = vld [vmem:[%s0 + $0xb8] sm:$0xff]
  %v38 = vld [vmem:[%s0 + $0xc0] sm:$0xff]
  %v39 = vld [vmem:[%s0 + $0xc8] sm:$0xff]
  %v40 = vld [vmem:[%s0 + $0xd0] sm:$0xff]
  %v41 = vld [vmem:[%s0 + $0xd8] sm:$0xff]
  %v42 = vld [vmem:[%s0 + $0xe0] sm:$0xff]
  %v43 = vld [vmem:[%s0 + $0xe8] sm:$0xff]
  %v44 = vld [vmem:[%s0 + $0xf0] sm:$0xff]
  %v45 = vld [vmem:[%s0 + $0xf8] sm:$0xff]
  %v46 = vld [vmem:[%s0 + $0x100] sm:$0xff]
  %v47 = vld [vmem:[%s0 + $0x108] sm:$0xff]
  %v48 = vld [vmem:[%s0 + $0x110] sm:$0xff]
  %v49 = vld [vmem:[%s0 + $0x118] sm:$0xff]
  %v50 = vld [vmem:[%s0 + $0x120] sm:$0xff]
  %v51 = vld [vmem:[%s0 + $0x128] sm:$0xff]
  %v52 = vld [vmem:[%s0 + $0x130] sm:$0xff]
  %v53 = vld [vmem:[%s0 + $0x138] sm:$0xff]
  %v54 = vld [vmem:[%s0 + $0x140] sm:$0xff]
  %v55 = vld [vmem:[%s0 + $0x148] sm:$0xff]
  %v56 = vld [vmem:[%s0 + $0x150] sm:$0xff]
  %v57 = vld [vmem:[%s0 + $0x158] sm:$0xff]
  %v58 = vld [vmem:[%s0 + $0x160] sm:$0xff]
  %v59 = vld [vmem:[%s0 + $0x168] sm:$0xff]
  %v60 = vld [vmem:[%s0 + $0x170] sm:$0xff]
  %v61 = vld [vmem:[%s0 + $0x178] sm:$0xff]
  %v62 = vld [vmem:[%s0 + $0x180] sm:$0xff]
  %v63 = vld [vmem:[%s0 + $0x188] sm:$0xff]
  %v64 = vld [vmem:[%s0 + $0x190] sm:$0xff]
  %v65 = vld [vmem:[%s0 + $0x198] sm:$0xff]
  %v66 = vld [vmem:[%s0 + $0x1a0] sm:$0xff]
  %v67 = vld [vmem:[%s0 + $0x1a8] sm:$0xff]
  %v68 = vld [vmem:[%s0 + $0x1b0] sm:$0xff]
  %v69 = vld [vmem:[%s0 + $0x1b8] sm:$0xff]
  %v70 = vld [vmem:[%s0 + $0x1c0] sm:$0xff]
  %v71 = vld [vmem:[%s0 + $0x1c8] sm:$0xff]
  %v72 = vld [vmem:[%s0 + $0x1d0] sm:$0xff]
  %v73 = vld [vmem:[%s0 + $0x1d8] sm:$0xff]
  %v74 = vld [vmem:[%s0 + $0x1e0] sm:$0xff]
  %v75 = vld [vmem:[%s0 + $0x1e8] sm:$0xff]
  %v76 = vld [vmem:[%s0 + $0x1f0] sm:$0xff]
  %v77 = vld [vmem:[%s0 + $0x1f8] sm:$0xff]
  %v78 = vld [vmem:[%s1] sm:$0xf]
  %v79 = vld [vmem:[%s2] sm:$0x1]
  %v81 = vperm.slane %v79, 0
  %vm83 = vcmask 31744
  %v85 = vsel %vm83, %v14, 0
  %v88 = vsel %vm83, %v15, 0
  %v91 = vsel %vm83, %v16, 0
  %v94 = vsel %vm83, %v17, 0
  %v97 = vsel %vm83, %v18, 0
  %v100 = vsel %vm83, %v19, 0
  %v103 = vsel %vm83, %v20, 0
  %v106 = vsel %vm83, %v21, 0
  %v109 = vsel %vm83, %v22, 0
  %v112 = vsel %vm83, %v23, 0
  %v115 = vsel %vm83, %v24, 0
  %v118 = vsel %vm83, %v25, 0
  %v121 = vsel %vm83, %v26, 0
  %v124 = vsel %vm83, %v27, 0
  %v127 = vsel %vm83, %v28, 0
  %v130 = vsel %vm83, %v29, 0
  %v133 = vsel %vm83, %v30, 0
  %v136 = vsel %vm83, %v31, 0
  %v139 = vsel %vm83, %v32, 0
  %v142 = vsel %vm83, %v33, 0
  %v145 = vsel %vm83, %v34, 0
  %v148 = vsel %vm83, %v35, 0
  %v151 = vsel %vm83, %v36, 0
  %v154 = vsel %vm83, %v37, 0
  %v157 = vsel %vm83, %v38, 0
  %v160 = vsel %vm83, %v39, 0
  %v163 = vsel %vm83, %v40, 0
  %v166 = vsel %vm83, %v41, 0
  %v169 = vsel %vm83, %v42, 0
  %v172 = vsel %vm83, %v43, 0
  %v175 = vsel %vm83, %v44, 0
  %v178 = vsel %vm83, %v45, 0
  %v181 = vsel %vm83, %v46, 0
  %v184 = vsel %vm83, %v47, 0
  %v187 = vsel %vm83, %v48, 0
  %v190 = vsel %vm83, %v49, 0
  %v193 = vsel %vm83, %v50, 0
  %v196 = vsel %vm83, %v51, 0
  %v199 = vsel %vm83, %v52, 0
  %v202 = vsel %vm83, %v53, 0
  %v205 = vsel %vm83, %v54, 0
  %v208 = vsel %vm83, %v55, 0
  %v211 = vsel %vm83, %v56, 0
  %v214 = vsel %vm83, %v57, 0
  %v217 = vsel %vm83, %v58, 0
  %v220 = vsel %vm83, %v59, 0
  %v223 = vsel %vm83, %v60, 0
  %v226 = vsel %vm83, %v61, 0
  %v229 = vsel %vm83, %v62, 0
  %v232 = vsel %vm83, %v63, 0
  %v235 = vsel %vm83, %v64, 0
  %v238 = vsel %vm83, %v65, 0
  %v241 = vsel %vm83, %v66, 0
  %v244 = vsel %vm83, %v67, 0
  %v247 = vsel %vm83, %v68, 0
  %v250 = vsel %vm83, %v69, 0
  %v253 = vsel %vm83, %v70, 0
  %v256 = vsel %vm83, %v71, 0
  %v259 = vsel %vm83, %v72, 0
  %v262 = vsel %vm83, %v73, 0
  %v265 = vsel %vm83, %v74, 0
  %v268 = vsel %vm83, %v75, 0
  %v271 = vsel %vm83, %v76, 0
  %v274 = vsel %vm83, %v77, 0
  %vm276 = vcmask 1043456
  %v278 = vsel %vm276, %v78, 0
  %280 = vmatpush.msra.mxu0 0.0
  %281 = vmatpush.msra.mxu0 0.0
  %282 = vmatpush.msra.mxu0 0.0
  %283 = vmatpush.msra.mxu0 0.0
  %284 = vmatpush.msra.mxu0 0.0
  %285 = vmatpush.msra.mxu0 0.0
  %286 = vmatpush.msra.mxu0 0.0
  %287 = vmatpush.msra.mxu0 0.0
  %288 = vmatpush.msra.mxu0 0.0
  %289 = vmatpush.msra.mxu0 0.0
  %290 = vmatpush.msra.mxu0 0.0
  %291 = vmatpush.msra.mxu0 0.0
  %292 = vmatpush.msra.mxu0 0.0
  %293 = vmatpush.msra.mxu0 0.0
  %294 = vmatpush.msra.mxu0 0.0
  %295 = vmatpush.msra.mxu0 %v278
  %296 = vmatmul.f32.gmra.mxu0 %v85
  %v297 = vpop.f32.mrf.mxu0
  %v298 = vadd.f32 %v81, %v297
  %299 = vmatmul.f32.gmra.mxu0 %v88
  %v300 = vpop.f32.mrf.mxu0
  %v301 = vadd.f32 %v81, %v300
  %302 = vmatmul.f32.gmra.mxu0 %v91
  %v303 = vpop.f32.mrf.mxu0
  %v304 = vadd.f32 %v81, %v303
  %305 = vmatmul.f32.gmra.mxu0 %v94
  %v306 = vpop.f32.mrf.mxu0
  %v307 = vadd.f32 %v81, %v306
  %308 = vmatmul.f32.gmra.mxu0 %v97
  %v309 = vpop.f32.mrf.mxu0
  %v310 = vadd.f32 %v81, %v309
  %311 = vmatmul.f32.gmra.mxu0 %v100
  %v312 = vpop.f32.mrf.mxu0
  %v313 = vadd.f32 %v81, %v312
  %314 = vmatmul.f32.gmra.mxu0 %v103
  %v315 = vpop.f32.mrf.mxu0
  %v316 = vadd.f32 %v81, %v315
  %317 = vmatmul.f32.gmra.mxu0 %v106
  %v318 = vpop.f32.mrf.mxu0
  %v319 = vadd.f32 %v81, %v318
  %320 = vmatmul.f32.gmra.mxu0 %v109
  %v321 = vpop.f32.mrf.mxu0
  %v322 = vadd.f32 %v81, %v321
  %323 = vmatmul.f32.gmra.mxu0 %v112
  %v324 = vpop.f32.mrf.mxu0
  %v325 = vadd.f32 %v81, %v324
  %326 = vmatmul.f32.gmra.mxu0 %v115
  %v327 = vpop.f32.mrf.mxu0
  %v328 = vadd.f32 %v81, %v327
  %329 = vmatmul.f32.gmra.mxu0 %v118
  %v330 = vpop.f32.mrf.mxu0
  %v331 = vadd.f32 %v81, %v330
  %332 = vmatmul.f32.gmra.mxu0 %v121
  %v333 = vpop.f32.mrf.mxu0
  %v334 = vadd.f32 %v81, %v333
  %335 = vmatmul.f32.gmra.mxu0 %v124
  %v336 = vpop.f32.mrf.mxu0
  %v337 = vadd.f32 %v81, %v336
  %338 = vmatmul.f32.gmra.mxu0 %v127
  %v339 = vpop.f32.mrf.mxu0
  %v340 = vadd.f32 %v81, %v339
  %341 = vmatmul.f32.gmra.mxu0 %v130
  %v342 = vpop.f32.mrf.mxu0
  %v343 = vadd.f32 %v81, %v342
  %344 = vmatmul.f32.gmra.mxu0 %v133
  %v345 = vpop.f32.mrf.mxu0
  %v346 = vadd.f32 %v81, %v345
  %347 = vmatmul.f32.gmra.mxu0 %v136
  %v348 = vpop.f32.mrf.mxu0
  %v349 = vadd.f32 %v81, %v348
  %350 = vmatmul.f32.gmra.mxu0 %v139
  %v351 = vpop.f32.mrf.mxu0
  %v352 = vadd.f32 %v81, %v351
  %353 = vmatmul.f32.gmra.mxu0 %v142
  %v354 = vpop.f32.mrf.mxu0
  %v355 = vadd.f32 %v81, %v354
  %356 = vmatmul.f32.gmra.mxu0 %v145
  %v357 = vpop.f32.mrf.mxu0
  %v358 = vadd.f32 %v81, %v357
  %359 = vmatmul.f32.gmra.mxu0 %v148
  %v360 = vpop.f32.mrf.mxu0
  %v361 = vadd.f32 %v81, %v360
  %362 = vmatmul.f32.gmra.mxu0 %v151
  %v363 = vpop.f32.mrf.mxu0
  %v364 = vadd.f32 %v81, %v363
  %365 = vmatmul.f32.gmra.mxu0 %v154
  %v366 = vpop.f32.mrf.mxu0
  %v367 = vadd.f32 %v81, %v366
  %368 = vmatmul.f32.gmra.mxu0 %v157
  %v369 = vpop.f32.mrf.mxu0
  %v370 = vadd.f32 %v81, %v369
  %371 = vmatmul.f32.gmra.mxu0 %v160
  %v372 = vpop.f32.mrf.mxu0
  %v373 = vadd.f32 %v81, %v372
  %374 = vmatmul.f32.gmra.mxu0 %v163
  %v375 = vpop.f32.mrf.mxu0
  %v376 = vadd.f32 %v81, %v375
  %377 = vmatmul.f32.gmra.mxu0 %v166
  %v378 = vpop.f32.mrf.mxu0
  %v379 = vadd.f32 %v81, %v378
  %380 = vmatmul.f32.gmra.mxu0 %v169
  %v381 = vpop.f32.mrf.mxu0
  %v382 = vadd.f32 %v81, %v381
  %383 = vmatmul.f32.gmra.mxu0 %v172
  %v384 = vpop.f32.mrf.mxu0
  %v385 = vadd.f32 %v81, %v384
  %386 = vmatmul.f32.gmra.mxu0 %v175
  %v387 = vpop.f32.mrf.mxu0
  %v388 = vadd.f32 %v81, %v387
  %389 = vmatmul.f32.gmra.mxu0 %v178
  %v390 = vpop.f32.mrf.mxu0
  %v391 = vadd.f32 %v81, %v390
  %392 = vmatmul.f32.gmra.mxu0 %v181
  %v393 = vpop.f32.mrf.mxu0
  %v394 = vadd.f32 %v81, %v393
  %395 = vmatmul.f32.gmra.mxu0 %v184
  %v396 = vpop.f32.mrf.mxu0
  %v397 = vadd.f32 %v81, %v396
  %398 = vmatmul.f32.gmra.mxu0 %v187
  %v399 = vpop.f32.mrf.mxu0
  %v400 = vadd.f32 %v81, %v399
  %401 = vmatmul.f32.gmra.mxu0 %v190
  %v402 = vpop.f32.mrf.mxu0
  %v403 = vadd.f32 %v81, %v402
  %404 = vmatmul.f32.gmra.mxu0 %v193
  %v405 = vpop.f32.mrf.mxu0
  %v406 = vadd.f32 %v81, %v405
  %407 = vmatmul.f32.gmra.mxu0 %v196
  %v408 = vpop.f32.mrf.mxu0
  %v409 = vadd.f32 %v81, %v408
  %410 = vmatmul.f32.gmra.mxu0 %v199
  %v411 = vpop.f32.mrf.mxu0
  %v412 = vadd.f32 %v81, %v411
  %413 = vmatmul.f32.gmra.mxu0 %v202
  %v414 = vpop.f32.mrf.mxu0
  %v415 = vadd.f32 %v81, %v414
  %416 = vmatmul.f32.gmra.mxu0 %v205
  %v417 = vpop.f32.mrf.mxu0
  %v418 = vadd.f32 %v81, %v417
  %419 = vmatmul.f32.gmra.mxu0 %v208
  %v420 = vpop.f32.mrf.mxu0
  %v421 = vadd.f32 %v81, %v420
  %422 = vmatmul.f32.gmra.mxu0 %v211
  %v423 = vpop.f32.mrf.mxu0
  %v424 = vadd.f32 %v81, %v423
  %425 = vmatmul.f32.gmra.mxu0 %v214
  %v426 = vpop.f32.mrf.mxu0
  %v427 = vadd.f32 %v81, %v426
  %428 = vmatmul.f32.gmra.mxu0 %v217
  %v429 = vpop.f32.mrf.mxu0
  %v430 = vadd.f32 %v81, %v429
  %431 = vmatmul.f32.gmra.mxu0 %v220
  %v432 = vpop.f32.mrf.mxu0
  %v433 = vadd.f32 %v81, %v432
  %434 = vmatmul.f32.gmra.mxu0 %v223
  %v435 = vpop.f32.mrf.mxu0
  %v436 = vadd.f32 %v81, %v435
  %437 = vmatmul.f32.gmra.mxu0 %v226
  %v438 = vpop.f32.mrf.mxu0
  %v439 = vadd.f32 %v81, %v438
  %440 = vmatmul.f32.gmra.mxu0 %v229
  %v441 = vpop.f32.mrf.mxu0
  %v442 = vadd.f32 %v81, %v441
  %443 = vmatmul.f32.gmra.mxu0 %v232
  %v444 = vpop.f32.mrf.mxu0
  %v445 = vadd.f32 %v81, %v444
  %446 = vmatmul.f32.gmra.mxu0 %v235
  %v447 = vpop.f32.mrf.mxu0
  %v448 = vadd.f32 %v81, %v447
  %449 = vmatmul.f32.gmra.mxu0 %v238
  %v450 = vpop.f32.mrf.mxu0
  %v451 = vadd.f32 %v81, %v450
  %452 = vmatmul.f32.gmra.mxu0 %v241
  %v453 = vpop.f32.mrf.mxu0
  %v454 = vadd.f32 %v81, %v453
  %455 = vmatmul.f32.gmra.mxu0 %v244
  %v456 = vpop.f32.mrf.mxu0
  %v457 = vadd.f32 %v81, %v456
  %458 = vmatmul.f32.gmra.mxu0 %v247
  %v459 = vpop.f32.mrf.mxu0
  %v460 = vadd.f32 %v81, %v459
  %461 = vmatmul.f32.gmra.mxu0 %v250
  %v462 = vpop.f32.mrf.mxu0
  %v463 = vadd.f32 %v81, %v462
  %464 = vmatmul.f32.gmra.mxu0 %v253
  %v465 = vpop.f32.mrf.mxu0
  %v466 = vadd.f32 %v81, %v465
  %467 = vmatmul.f32.gmra.mxu0 %v256
  %v468 = vpop.f32.mrf.mxu0
  %v469 = vadd.f32 %v81, %v468
  %470 = vmatmul.f32.gmra.mxu0 %v259
  %v471 = vpop.f32.mrf.mxu0
  %v472 = vadd.f32 %v81, %v471
  %473 = vmatmul.f32.gmra.mxu0 %v262
  %v474 = vpop.f32.mrf.mxu0
  %v475 = vadd.f32 %v81, %v474
  %476 = vmatmul.f32.gmra.mxu0 %v265
  %v477 = vpop.f32.mrf.mxu0
  %v478 = vadd.f32 %v81, %v477
  %479 = vmatmul.f32.gmra.mxu0 %v268
  %v480 = vpop.f32.mrf.mxu0
  %v481 = vadd.f32 %v81, %v480
  %482 = vmatmul.f32.gmra.mxu0 %v271
  %v483 = vpop.f32.mrf.mxu0
  %v484 = vadd.f32 %v81, %v483
  %485 = vmatmul.f32.gmra.mxu0 %v274
  %v486 = vpop.f32.mrf.mxu0
  %v487 = vadd.f32 %v81, %v486
  %488 = vdwg.mxu0
  %489 = vst [vmem:[%s3] sm:$0xff] %v298
  %490 = vst [vmem:[%s3 + $0x8] sm:$0xff] %v301
  %491 = vst [vmem:[%s3 + $0x10] sm:$0xff] %v304
  %492 = vst [vmem:[%s3 + $0x18] sm:$0xff] %v307
  %493 = vst [vmem:[%s3 + $0x20] sm:$0xff] %v310
  %494 = vst [vmem:[%s3 + $0x28] sm:$0xff] %v313
  %495 = vst [vmem:[%s3 + $0x30] sm:$0xff] %v316
  %496 = vst [vmem:[%s3 + $0x38] sm:$0xff] %v319
  %497 = vst [vmem:[%s3 + $0x40] sm:$0xff] %v322
  %498 = vst [vmem:[%s3 + $0x48] sm:$0xff] %v325
  %499 = vst [vmem:[%s3 + $0x50] sm:$0xff] %v328
  %500 = vst [vmem:[%s3 + $0x58] sm:$0xff] %v331
  %501 = vst [vmem:[%s3 + $0x60] sm:$0xff] %v334
  %502 = vst [vmem:[%s3 + $0x68] sm:$0xff] %v337
  %503 = vst [vmem:[%s3 + $0x70] sm:$0xff] %v340
  %504 = vst [vmem:[%s3 + $0x78] sm:$0xff] %v343
  %505 = vst [vmem:[%s3 + $0x80] sm:$0xff] %v346
  %506 = vst [vmem:[%s3 + $0x88] sm:$0xff] %v349
  %507 = vst [vmem:[%s3 + $0x90] sm:$0xff] %v352
  %508 = vst [vmem:[%s3 + $0x98] sm:$0xff] %v355
  %509 = vst [vmem:[%s3 + $0xa0] sm:$0xff] %v358
  %510 = vst [vmem:[%s3 + $0xa8] sm:$0xff] %v361
  %511 = vst [vmem:[%s3 + $0xb0] sm:$0xff] %v364
  %512 = vst [vmem:[%s3 + $0xb8] sm:$0xff] %v367
  %513 = vst [vmem:[%s3 + $0xc0] sm:$0xff] %v370
  %514 = vst [vmem:[%s3 + $0xc8] sm:$0xff] %v373
  %515 = vst [vmem:[%s3 + $0xd0] sm:$0xff] %v376
  %516 = vst [vmem:[%s3 + $0xd8] sm:$0xff] %v379
  %517 = vst [vmem:[%s3 + $0xe0] sm:$0xff] %v382
  %518 = vst [vmem:[%s3 + $0xe8] sm:$0xff] %v385
  %519 = vst [vmem:[%s3 + $0xf0] sm:$0xff] %v388
  %520 = vst [vmem:[%s3 + $0xf8] sm:$0xff] %v391
  %521 = vst [vmem:[%s3 + $0x100] sm:$0xff] %v394
  %522 = vst [vmem:[%s3 + $0x108] sm:$0xff] %v397
  %523 = vst [vmem:[%s3 + $0x110] sm:$0xff] %v400
  %524 = vst [vmem:[%s3 + $0x118] sm:$0xff] %v403
  %525 = vst [vmem:[%s3 + $0x120] sm:$0xff] %v406
  %526 = vst [vmem:[%s3 + $0x128] sm:$0xff] %v409
  %527 = vst [vmem:[%s3 + $0x130] sm:$0xff] %v412
  %528 = vst [vmem:[%s3 + $0x138] sm:$0xff] %v415
  %529 = vst [vmem:[%s3 + $0x140] sm:$0xff] %v418
  %530 = vst [vmem:[%s3 + $0x148] sm:$0xff] %v421
  %531 = vst [vmem:[%s3 + $0x150] sm:$0xff] %v424
  %532 = vst [vmem:[%s3 + $0x158] sm:$0xff] %v427
  %533 = vst [vmem:[%s3 + $0x160] sm:$0xff] %v430
  %534 = vst [vmem:[%s3 + $0x168] sm:$0xff] %v433
  %535 = vst [vmem:[%s3 + $0x170] sm:$0xff] %v436
  %536 = vst [vmem:[%s3 + $0x178] sm:$0xff] %v439
  %537 = vst [vmem:[%s3 + $0x180] sm:$0xff] %v442
  %538 = vst [vmem:[%s3 + $0x188] sm:$0xff] %v445
  %539 = vst [vmem:[%s3 + $0x190] sm:$0xff] %v448
  %540 = vst [vmem:[%s3 + $0x198] sm:$0xff] %v451
  %541 = vst [vmem:[%s3 + $0x1a0] sm:$0xff] %v454
  %542 = vst [vmem:[%s3 + $0x1a8] sm:$0xff] %v457
  %543 = vst [vmem:[%s3 + $0x1b0] sm:$0xff] %v460
  %544 = vst [vmem:[%s3 + $0x1b8] sm:$0xff] %v463
  %545 = vst [vmem:[%s3 + $0x1c0] sm:$0xff] %v466
  %546 = vst [vmem:[%s3 + $0x1c8] sm:$0xff] %v469
  %547 = vst [vmem:[%s3 + $0x1d0] sm:$0xff] %v472
  %548 = vst [vmem:[%s3 + $0x1d8] sm:$0xff] %v475
  %549 = vst [vmem:[%s3 + $0x1e0] sm:$0xff] %v478
  %550 = vst [vmem:[%s3 + $0x1e8] sm:$0xff] %v481
  %551 = vst [vmem:[%s3 + $0x1f0] sm:$0xff] %v484
  %552 = vst [vmem:[%s3 + $0x1f8] sm:$0xff] %v487
  // Predicated region
  $region14: #{model_warper_forward.1} parent=0 // pred_check
    _
  $region15: #{model_warper_forward.1} parent=0 // pred_check_branch
    %554 = sbr.rel (0) target = $region17
  $region16: #{model_warper_forward.1} parent=0 // pred_region
    _
  $region17: #{model_warper_forward.1} parent=0 // pred_fallthru
    _
  // Predicated region
  $region18: #{model_warper_forward.1} parent=0 // pred_check
    _
  $region19: #{model_warper_forward.1} parent=0 // pred_check_branch
    %556 = sbr.rel (0) target = $region21
  $region20: #{model_warper_forward.1} parent=0 // pred_region
    _
  $region21: #{model_warper_forward.1} parent=0 // pred_fallthru
    _

</llo_original>
